<compile_context>
chip_gen: v7x
topology: tpu7x:2x2x1
jax: 0.10.0
libtpu: 0.0.40
codegen_flags: <defaults>
</compile_context>

<pallas_src>
import functools

import jax
import jax.numpy as jnp
from jax.experimental import pallas as pl
from jax.experimental.pallas import tpu as pltpu


def _leaky_relu(x, negative_slope=0.2):
    return jnp.where(x >= 0, x, negative_slope * x)


def _round_up(n, m):
    return (n + m - 1) // m * m


def _cdiv(a, b):
    return (a + b - 1) // b


def _pick_pack(nROI):
    """How many batch rows to fold into the 128-lane dimension."""
    if nROI >= 128 or 128 % nROI != 0:
        return 1
    return 128 // nROI


# -----------------------------------------------------------------------------
# Kernel
# -----------------------------------------------------------------------------
def ldisc_kernel(x_ref, w1_ref, b1_ref, w2_ref, b2_ref, w3_ref, b3_ref, o_ref):
    """Fused 3-layer MLP: (x @ W1 + b1) -lrelu-> (@ W2 + b2) -lrelu-> (@ W3 + b3)."""
    x = x_ref[...]

    h = jnp.dot(x, w1_ref[...], preferred_element_type=jnp.float32) + b1_ref[...]
    h = _leaky_relu(h)

    h = jnp.dot(h.astype(w2_ref.dtype), w2_ref[...],
                preferred_element_type=jnp.float32) + b2_ref[...]
    h = _leaky_relu(h)

    out = jnp.dot(h.astype(w3_ref.dtype), w3_ref[...],
                  preferred_element_type=jnp.float32) + b3_ref[...]
    o_ref[...] = out.astype(o_ref.dtype)


# -----------------------------------------------------------------------------
# One-time parameter preparation (hoisted out of the forward pass)
# -----------------------------------------------------------------------------
def prepare_params(params, dtype=jnp.float32):
    """Build lane-packed (block-diagonal) weights once.

    params: dict w1,b1,w2,b2,w3,b3 with shapes [in,out] / [1,out] (f32).
    dtype:  dtype of the MXU operands (f32 for exact parity, bf16 to halve
            HBM traffic of the weight/x reads). Biases stay f32.
    """
    nROI = params["w1"].shape[0]
    pack = _pick_pack(nROI)
    eye = jnp.eye(pack, dtype=jnp.float32)
    prep = {}
    for idx in (1, 2, 3):
        w = params[f"w{idx}"]
        b = params[f"b{idx}"].reshape(1, -1)
        prep[f"w{idx}"] = jnp.kron(eye, w).astype(dtype)      # [pack*in, pack*out]
        prep[f"b{idx}"] = jnp.tile(b, (1, pack)).astype(jnp.float32)  # [1, pack*out]
    return prep


# -----------------------------------------------------------------------------
# Forward wrapper
# -----------------------------------------------------------------------------
@functools.partial(jax.jit, static_argnames=("batch_tile",))
def ldiscriminator_forward(x, prep, batch_tile=4096):
    """x: [B, nROI] (f32 or bf16, matching prep weight dtype). Returns [B, 2] f32.

    batch_tile is an upper bound on the per-step tile, in *packed* rows
    (each packed row holds `pack` original rows).
    """
    B, nROI = x.shape
    pack = _pick_pack(nROI)
    h1 = prep["w1"].shape[1] // pack
    h2 = prep["w2"].shape[1] // pack
    n_out = prep["w3"].shape[1] // pack

    if jnp.dtype(x.dtype) != jnp.dtype(prep["w1"].dtype):
        raise ValueError(
            f"x dtype {x.dtype} must match prepared weight dtype {prep['w1'].dtype}; "
            "cast x upstream (no wrapper-side astype) or re-run prepare_params.")

    x_itemsize = jnp.dtype(x.dtype).itemsize
    min_mult = 32 // x_itemsize          # sublane multiple: 8 for f32, 16 for bf16

    # --- packed-row count, padded only to a sublane-aligned multiple of pack ---
    PB = _round_up(max(B, 1), pack * min_mult) // pack

    # --- tile selection: amortize per-step overhead, respect VMEM budget ------
    # VMEM per packed row (double buffered): lane-dense x block + the output
    # block, which is lane-PADDED to 128 lanes in VMEM even though only
    # pack*n_out lanes are stored to HBM.
    out_lane_bytes = max(pack * n_out, 128) * 4
    per_row_bytes = 2 * (pack * nROI * x_itemsize + out_lane_bytes)
    vmem_budget = 12 << 20               # fits v5e's 16 MiB scoped default
    tile_cap = max(min_mult, (vmem_budget // per_row_bytes) // min_mult * min_mult)

    target = max(min_mult, (min(int(batch_tile), tile_cap) // min_mult) * min_mult)
    n_steps = _cdiv(PB, target)
    if n_steps == 1 and PB >= 2 * min_mult:
        n_steps = 2                      # >= 2 grid steps so both v7x TCs get work
    tile = _round_up(_cdiv(PB, n_steps), min_mult)
    PBp = n_steps * tile
    rows = PBp * pack

    # --- pad (only if needed) and pack rows into the lane axis ---------------
    if rows != B:
        x = jnp.pad(x, ((0, rows - B), (0, 0)))
    x_packed = x.reshape(PBp, pack * nROI)   # free row-major view

    # Weights/biases are tiny -> whole tensor, constant block index, so the
    # pipeliner keeps them resident in VMEM without re-DMA.
    def full(shape):
        return pl.BlockSpec(shape, lambda i: (0,) * len(shape))

    out_packed = pl.pallas_call(
        ldisc_kernel,
        out_shape=jax.ShapeDtypeStruct((PBp, pack * n_out), jnp.float32),
        grid_spec=pltpu.PrefetchScalarGridSpec(
            num_scalar_prefetch=0,
            grid=(n_steps,),
            in_specs=[
                pl.BlockSpec((tile, pack * nROI), lambda i: (i, 0)),  # packed x tile
                full((pack * nROI, pack * h1)),
                full((1, pack * h1)),
                full((pack * h1, pack * h2)),
                full((1, pack * h2)),
                full((pack * h2, pack * n_out)),
                full((1, pack * n_out)),
            ],
            out_specs=pl.BlockSpec((tile, pack * n_out), lambda i: (i, 0)),
        ),
        compiler_params=pltpu.CompilerParams(
            dimension_semantics=("parallel",),   # shard batch steps across v7x cores
        ),
    )(x_packed, prep["w1"], prep["b1"], prep["w2"], prep["b2"],
      prep["w3"], prep["b3"])

    # Unpack [PBp, pack*n_out] -> [rows, n_out] (free view) and drop padding rows.
    return out_packed.reshape(rows, n_out)[:B]


# -----------------------------------------------------------------------------
# Reference / init / demo
# -----------------------------------------------------------------------------
def init_params(key, nROI):
    """PyTorch nn.Linear default init: U(-1/sqrt(fan_in), +1/sqrt(fan_in))."""
    dims = [(nROI, nROI // 2), (nROI // 2, nROI // 4), (nROI // 4, 2)]
    params = {}
    for idx, (fan_in, fan_out) in enumerate(dims, start=1):
        key, kw, kb = jax.random.split(key, 3)
        bound = 1.0 / (fan_in ** 0.5)
        params[f"w{idx}"] = jax.random.uniform(
            kw, (fan_in, fan_out), jnp.float32, minval=-bound, maxval=bound)
        params[f"b{idx}"] = jax.random.uniform(
            kb, (1, fan_out), jnp.float32, minval=-bound, maxval=bound)
    return params


def reference_forward(x, params):
    h1 = _leaky_relu(x @ params["w1"] + params["b1"])
    h2 = _leaky_relu(h1 @ params["w2"] + params["b2"])
    return h2 @ params["w3"] + params["b3"]


if __name__ == "__main__":
    nROI = 32          # -> hidden sizes 16, 8, output 2; pack = 4 rows per 128 lanes
    B = 64
    key = jax.random.PRNGKey(0)
    key, kx = jax.random.split(key)

    x = jax.random.normal(kx, (B, nROI), jnp.float32)
    params = init_params(key, nROI)

    # ---- f32 path: exact parity with the reference ----
    prep_f32 = prepare_params(params, jnp.float32)
    out = jax.block_until_ready(ldiscriminator_forward(x, prep_f32))
    ref = reference_forward(x, params)
    assert out.shape == (B, 2), out.shape
    err = jnp.max(jnp.abs(out - ref))
    assert jnp.allclose(out, ref, atol=1e-4, rtol=1e-4), f"max abs err {err}"

    # ---- padding path: batch not aligned to pack * sublane ----
    x_odd = x[:50]
    out_odd = jax.block_until_ready(ldiscriminator_forward(x_odd, prep_f32))
    ref_odd = reference_forward(x_odd, params)
    assert out_odd.shape == (50, 2), out_odd.shape
    assert jnp.allclose(out_odd, ref_odd, atol=1e-4, rtol=1e-4), (
        f"max abs err {jnp.max(jnp.abs(out_odd - ref_odd))}")

    # ---- bf16 path: x cast upstream (API boundary), looser tolerance ----
    prep_bf16 = prepare_params(params, jnp.bfloat16)
    x_bf16 = x.astype(jnp.bfloat16)   # producer-side cast, not inside the wrapper
    out_bf = jax.block_until_ready(ldiscriminator_forward(x_bf16, prep_bf16))
    assert out_bf.shape == (B, 2), out_bf.shape
    assert jnp.allclose(out_bf, ref, atol=5e-2, rtol=5e-2), (
        f"bf16 max abs err {jnp.max(jnp.abs(out_bf - ref))}")

    print("KERNEL_OK")
</pallas_src>

<mosaic_0001>
module attributes {stable_mosaic.version = 11 : i64} {
  func.func @ldisc_kernel(%arg0: i32, %arg1: memref<8x128xf32, #tpu.memory_space<vmem>>, %arg2: memref<128x64xf32, #tpu.memory_space<vmem>>, %arg3: memref<1x64xf32, #tpu.memory_space<vmem>>, %arg4: memref<64x32xf32, #tpu.memory_space<vmem>>, %arg5: memref<1x32xf32, #tpu.memory_space<vmem>>, %arg6: memref<32x8xf32, #tpu.memory_space<vmem>>, %arg7: memref<1x8xf32, #tpu.memory_space<vmem>>, %arg8: memref<8x8xf32, #tpu.memory_space<vmem>>) attributes {dimension_semantics = [#tpu.dimension_semantics<parallel>], iteration_bounds = array<i64: 2>, scalar_prefetch = 0 : i64, scratch_operands = 0 : i64, tpu.core_type = #tpu.core_type<tc>, window_params = [{transform_indices = @transform_0, window_bounds = array<i64: 8, 128>}, {pipeline_mode = #tpu.pipeline_mode<synchronous>, transform_indices = @transform_1, window_bounds = array<i64: 128, 64>}, {pipeline_mode = #tpu.pipeline_mode<synchronous>, transform_indices = @transform_2, window_bounds = array<i64: 1, 64>}, {pipeline_mode = #tpu.pipeline_mode<synchronous>, transform_indices = @transform_3, window_bounds = array<i64: 64, 32>}, {pipeline_mode = #tpu.pipeline_mode<synchronous>, transform_indices = @transform_4, window_bounds = array<i64: 1, 32>}, {pipeline_mode = #tpu.pipeline_mode<synchronous>, transform_indices = @transform_5, window_bounds = array<i64: 32, 8>}, {pipeline_mode = #tpu.pipeline_mode<synchronous>, transform_indices = @transform_6, window_bounds = array<i64: 1, 8>}, {transform_indices = @transform_7, window_bounds = array<i64: 8, 8>}]} {
    %c0 = arith.constant 0 : index
    %c0_0 = arith.constant 0 : index
    %0 = vector.load %arg1[%c0, %c0_0] : memref<8x128xf32, #tpu.memory_space<vmem>>, vector<8x128xf32>
    %c0_1 = arith.constant 0 : index
    %c0_2 = arith.constant 0 : index
    %1 = vector.load %arg2[%c0_1, %c0_2] : memref<128x64xf32, #tpu.memory_space<vmem>>, vector<128x64xf32>
    %cst = arith.constant dense<0.000000e+00> : vector<8x64xf32>
    %2 = tpu.matmul %0, %1, %cst {dimension_numbers = #tpu.dot_dimension_numbers<[1], [0], [0], [1], [0, 0, 1, 1], [], []>} : vector<8x128xf32>, vector<128x64xf32>, vector<8x64xf32> -> vector<8x64xf32>
    %c0_3 = arith.constant 0 : index
    %c0_4 = arith.constant 0 : index
    %3 = vector.load %arg3[%c0_3, %c0_4] : memref<1x64xf32, #tpu.memory_space<vmem>>, vector<1x64xf32>
    %4 = vector.broadcast %3 : vector<1x64xf32> to vector<8x64xf32>
    %5 = arith.addf %2, %4 : vector<8x64xf32>
    %cst_5 = arith.constant 0.000000e+00 : f32
    %6 = vector.broadcast %cst_5 : f32 to vector<8x64xf32>
    %7 = arith.cmpf oge, %5, %6 : vector<8x64xf32>
    %cst_6 = arith.constant 2.000000e-01 : f32
    %8 = vector.broadcast %cst_6 : f32 to vector<8x64xf32>
    %9 = arith.mulf %8, %5 : vector<8x64xf32>
    %10 = arith.select %7, %5, %9 : vector<8x64xi1>, vector<8x64xf32>
    %c0_7 = arith.constant 0 : index
    %c0_8 = arith.constant 0 : index
    %11 = vector.load %arg4[%c0_7, %c0_8] : memref<64x32xf32, #tpu.memory_space<vmem>>, vector<64x32xf32>
    %cst_9 = arith.constant dense<0.000000e+00> : vector<8x32xf32>
    %12 = tpu.matmul %10, %11, %cst_9 {dimension_numbers = #tpu.dot_dimension_numbers<[1], [0], [0], [1], [0, 0, 1, 1], [], []>} : vector<8x64xf32>, vector<64x32xf32>, vector<8x32xf32> -> vector<8x32xf32>
    %c0_10 = arith.constant 0 : index
    %c0_11 = arith.constant 0 : index
    %13 = vector.load %arg5[%c0_10, %c0_11] : memref<1x32xf32, #tpu.memory_space<vmem>>, vector<1x32xf32>
    %14 = vector.broadcast %13 : vector<1x32xf32> to vector<8x32xf32>
    %15 = arith.addf %12, %14 : vector<8x32xf32>
    %cst_12 = arith.constant 0.000000e+00 : f32
    %16 = vector.broadcast %cst_12 : f32 to vector<8x32xf32>
    %17 = arith.cmpf oge, %15, %16 : vector<8x32xf32>
    %cst_13 = arith.constant 2.000000e-01 : f32
    %18 = vector.broadcast %cst_13 : f32 to vector<8x32xf32>
    %19 = arith.mulf %18, %15 : vector<8x32xf32>
    %20 = arith.select %17, %15, %19 : vector<8x32xi1>, vector<8x32xf32>
    %c0_14 = arith.constant 0 : index
    %c0_15 = arith.constant 0 : index
    %21 = vector.load %arg6[%c0_14, %c0_15] : memref<32x8xf32, #tpu.memory_space<vmem>>, vector<32x8xf32>
    %cst_16 = arith.constant dense<0.000000e+00> : vector<8x8xf32>
    %22 = tpu.matmul %20, %21, %cst_16 {dimension_numbers = #tpu.dot_dimension_numbers<[1], [0], [0], [1], [0, 0, 1, 1], [], []>} : vector<8x32xf32>, vector<32x8xf32>, vector<8x8xf32> -> vector<8x8xf32>
    %c0_17 = arith.constant 0 : index
    %c0_18 = arith.constant 0 : index
    %23 = vector.load %arg7[%c0_17, %c0_18] : memref<1x8xf32, #tpu.memory_space<vmem>>, vector<1x8xf32>
    %24 = vector.broadcast %23 : vector<1x8xf32> to vector<8x8xf32>
    %25 = arith.addf %22, %24 : vector<8x8xf32>
    %c0_19 = arith.constant 0 : index
    %c0_20 = arith.constant 0 : index
    %26 = vector.load %arg8[%c0_19, %c0_20] : memref<8x8xf32, #tpu.memory_space<vmem>>, vector<8x8xf32>
    tpu.vector_store %arg8[%c0_19, %c0_20], %25 {strides = array<i32>} : memref<8x8xf32, #tpu.memory_space<vmem>>, vector<8x8xf32>,
    return
  }
  func.func @transform_0(%arg0: i32) -> (i32, i32) {
    %c0_i32 = arith.constant 0 : i32
    %c0_i32_0 = arith.constant 0 : i32
    return %arg0, %c0_i32 : i32, i32
  }
  func.func @transform_1(%arg0: i32) -> (i32, i32) {
    %c0_i32 = arith.constant 0 : i32
    %c0_i32_0 = arith.constant 0 : i32
    %c0_i32_1 = arith.constant 0 : i32
    return %c0_i32, %c0_i32_0 : i32, i32
  }
  func.func @transform_2(%arg0: i32) -> (i32, i32) {
    %c0_i32 = arith.constant 0 : i32
    %c0_i32_0 = arith.constant 0 : i32
    %c0_i32_1 = arith.constant 0 : i32
    return %c0_i32, %c0_i32_0 : i32, i32
  }
  func.func @transform_3(%arg0: i32) -> (i32, i32) {
    %c0_i32 = arith.constant 0 : i32
    %c0_i32_0 = arith.constant 0 : i32
    %c0_i32_1 = arith.constant 0 : i32
    return %c0_i32, %c0_i32_0 : i32, i32
  }
  func.func @transform_4(%arg0: i32) -> (i32, i32) {
    %c0_i32 = arith.constant 0 : i32
    %c0_i32_0 = arith.constant 0 : i32
    %c0_i32_1 = arith.constant 0 : i32
    return %c0_i32, %c0_i32_0 : i32, i32
  }
  func.func @transform_5(%arg0: i32) -> (i32, i32) {
    %c0_i32 = arith.constant 0 : i32
    %c0_i32_0 = arith.constant 0 : i32
    %c0_i32_1 = arith.constant 0 : i32
    return %c0_i32, %c0_i32_0 : i32, i32
  }
  func.func @transform_6(%arg0: i32) -> (i32, i32) {
    %c0_i32 = arith.constant 0 : i32
    %c0_i32_0 = arith.constant 0 : i32
    %c0_i32_1 = arith.constant 0 : i32
    return %c0_i32, %c0_i32_0 : i32, i32
  }
  func.func @transform_7(%arg0: i32) -> (i32, i32) {
    %c0_i32 = arith.constant 0 : i32
    %c0_i32_0 = arith.constant 0 : i32
    return %arg0, %c0_i32 : i32, i32
  }
}

</mosaic_0001>

<llo_original>
// kernel: ldiscriminator_forward.1
$region0: #{ldiscriminator_forward.1}
  #allocation0 [shape = 'u32[]', space=smem, size = 0x4, offset = 0x4, fixed_abs, tag = 'smem constant byte address 0x4 - core index']
  #allocation1 [shape = 'u32[144,128]{1,0:T(1,128)}', space=vmem, size = 0x12000, scoped, tag = 'internal scratch']
  %s0 = inlined_call_operand.vmem [shape: f32[16,128], index: 0, kind: input, shape index: {}]
  %s1 = inlined_call_operand.vmem [shape: f32[128,64], index: 1, kind: input, shape index: {}]
  %s2 = inlined_call_operand.vmem [shape: f32[1,64], index: 2, kind: input, shape index: {}]
  %s3 = inlined_call_operand.vmem [shape: f32[64,32], index: 3, kind: input, shape index: {}]
  %s4 = inlined_call_operand.vmem [shape: f32[1,32], index: 4, kind: input, shape index: {}]
  %s5 = inlined_call_operand.vmem [shape: f32[32,8], index: 5, kind: input, shape index: {}]
  %s6 = inlined_call_operand.vmem [shape: f32[1,8], index: 6, kind: input, shape index: {}]
  %s7 = inlined_call_operand.vmem [shape: f32[16,8], index: 7, kind: output, shape index: {}]
  %s8 = sld [smem:[#allocation0]]
  $region61: #{ldiscriminator_forward.1} parent=0
    _
  %s10 = ssub.s32 1, %s8
  %s11 = scalar_select 0, %s10, %s8
  loop: start=0, step=1, limit=4
  $region2: #{ldiscriminator_forward.1} parent=0 // loop_pre_header
    _
  $region3: #{ldiscriminator_forward.1} parent=0 // loop_header
    %s13 = sphi 0, %s17
    %p14 = scmp.ge.s32.totalorder %s13, 4
    %s23 = sphi 0, %s25
    %s26 = sphi 0, %s23
    %s27 = sphi 0, %s26
    %s43 = sphi 0, %s27
    %s47 = sphi 0, %s47
    %s49 = sphi 0, %s47
    %s50 = sphi 0, %s49
    %s64 = sphi 0, %s50
    %s68 = sphi 0, %s68
    %s70 = sphi 0, %s68
    %s71 = sphi 0, %s70
    %s85 = sphi 0, %s71
    %s89 = sphi 0, %s89
    %s91 = sphi 0, %s89
    %s92 = sphi 0, %s91
    %s106 = sphi 0, %s92
    %s110 = sphi 0, %s110
    %s112 = sphi 0, %s110
    %s113 = sphi 0, %s112
    %s127 = sphi 0, %s113
    %s131 = sphi 0, %s131
    %s133 = sphi 0, %s131
    %s134 = sphi 0, %s133
    %s148 = sphi 0, %s134
    %s152 = sphi 0, %s152
    %s154 = sphi 0, %s152
    %s155 = sphi 0, %s154
    %s169 = sphi 0, %s155
    %s175 = sphi 0, %s177
    %s178 = sphi 0, %s175
    %s179 = sphi 0, %s178
    %s195 = sphi 0, %s179
  $region4: #{ldiscriminator_forward.1} parent=0 // loop_header_branch
    %16 = sbr.rel (%p14) target = $region8
  $region5: #{ldiscriminator_forward.1} parent=0 // loop_body
    %s18 = ssub.s32 %s13, 1
    %s19 = ssub.s32 %s13, 2
    %s20 = sadd.s32 %s13, 1
    %s21 = ssub.s32 %s13, %s20
    %p22 = scmp.eq.s32.totalorder %s21, 0
    %s24 = sadd.s32 %s23, 1
    %s25 = scalar_select %p22, %s23, %s24
    %p28 = pneg %p22
    %p29 = scmp.eq.s32.totalorder %s13, 1
    %p30 = por %p28, %p29
    %p31 = scmp.ne.s32.totalorder %s23, %s26
    %p32 = scmp.eq.s32.totalorder %s13, 0
    %p33 = por %p31, %p32
    %p34 = scmp.ne.s32.totalorder %s23, %s26
    %p35 = scmp.eq.s32.totalorder %s18, 1
    %p36 = por %p34, %p35
    %p37 = scmp.ne.s32.totalorder %s26, %s27
    %p38 = scmp.eq.s32.totalorder %s18, 0
    %p39 = por %p37, %p38
    %p40 = scmp.ne.s32.totalorder %s26, %s27
    %p41 = scmp.eq.s32.totalorder %s19, 1
    %p42 = por %p40, %p41
    %p44 = scmp.ne.s32.totalorder %s27, %s43
    %p45 = scmp.eq.s32.totalorder %s19, 0
    %p46 = por %p44, %p45
    %s48 = sadd.s32 %s47, 1
    %p51 = scmp.eq.s32.totalorder %s13, 1
    %p52 = scmp.ne.s32.totalorder %s47, %s49
    %p53 = scmp.eq.s32.totalorder %s13, 0
    %p54 = por %p52, %p53
    %p55 = scmp.ne.s32.totalorder %s47, %s49
    %p56 = scmp.eq.s32.totalorder %s18, 1
    %p57 = por %p55, %p56
    %p58 = scmp.ne.s32.totalorder %s49, %s50
    %p59 = scmp.eq.s32.totalorder %s18, 0
    %p60 = por %p58, %p59
    %p61 = scmp.ne.s32.totalorder %s49, %s50
    %p62 = scmp.eq.s32.totalorder %s19, 1
    %p63 = por %p61, %p62
    %p65 = scmp.ne.s32.totalorder %s50, %s64
    %p66 = scmp.eq.s32.totalorder %s19, 0
    %p67 = por %p65, %p66
    %s69 = sadd.s32 %s68, 1
    %p72 = scmp.eq.s32.totalorder %s13, 1
    %p73 = scmp.ne.s32.totalorder %s68, %s70
    %p74 = scmp.eq.s32.totalorder %s13, 0
    %p75 = por %p73, %p74
    %p76 = scmp.ne.s32.totalorder %s68, %s70
    %p77 = scmp.eq.s32.totalorder %s18, 1
    %p78 = por %p76, %p77
    %p79 = scmp.ne.s32.totalorder %s70, %s71
    %p80 = scmp.eq.s32.totalorder %s18, 0
    %p81 = por %p79, %p80
    %p82 = scmp.ne.s32.totalorder %s70, %s71
    %p83 = scmp.eq.s32.totalorder %s19, 1
    %p84 = por %p82, %p83
    %p86 = scmp.ne.s32.totalorder %s71, %s85
    %p87 = scmp.eq.s32.totalorder %s19, 0
    %p88 = por %p86, %p87
    %s90 = sadd.s32 %s89, 1
    %p93 = scmp.eq.s32.totalorder %s13, 1
    %p94 = scmp.ne.s32.totalorder %s89, %s91
    %p95 = scmp.eq.s32.totalorder %s13, 0
    %p96 = por %p94, %p95
    %p97 = scmp.ne.s32.totalorder %s89, %s91
    %p98 = scmp.eq.s32.totalorder %s18, 1
    %p99 = por %p97, %p98
    %p100 = scmp.ne.s32.totalorder %s91, %s92
    %p101 = scmp.eq.s32.totalorder %s18, 0
    %p102 = por %p100, %p101
    %p103 = scmp.ne.s32.totalorder %s91, %s92
    %p104 = scmp.eq.s32.totalorder %s19, 1
    %p105 = por %p103, %p104
    %p107 = scmp.ne.s32.totalorder %s92, %s106
    %p108 = scmp.eq.s32.totalorder %s19, 0
    %p109 = por %p107, %p108
    %s111 = sadd.s32 %s110, 1
    %p114 = scmp.eq.s32.totalorder %s13, 1
    %p115 = scmp.ne.s32.totalorder %s110, %s112
    %p116 = scmp.eq.s32.totalorder %s13, 0
    %p117 = por %p115, %p116
    %p118 = scmp.ne.s32.totalorder %s110, %s112
    %p119 = scmp.eq.s32.totalorder %s18, 1
    %p120 = por %p118, %p119
    %p121 = scmp.ne.s32.totalorder %s112, %s113
    %p122 = scmp.eq.s32.totalorder %s18, 0
    %p123 = por %p121, %p122
    %p124 = scmp.ne.s32.totalorder %s112, %s113
    %p125 = scmp.eq.s32.totalorder %s19, 1
    %p126 = por %p124, %p125
    %p128 = scmp.ne.s32.totalorder %s113, %s127
    %p129 = scmp.eq.s32.totalorder %s19, 0
    %p130 = por %p128, %p129
    %s132 = sadd.s32 %s131, 1
    %p135 = scmp.eq.s32.totalorder %s13, 1
    %p136 = scmp.ne.s32.totalorder %s131, %s133
    %p137 = scmp.eq.s32.totalorder %s13, 0
    %p138 = por %p136, %p137
    %p139 = scmp.ne.s32.totalorder %s131, %s133
    %p140 = scmp.eq.s32.totalorder %s18, 1
    %p141 = por %p139, %p140
    %p142 = scmp.ne.s32.totalorder %s133, %s134
    %p143 = scmp.eq.s32.totalorder %s18, 0
    %p144 = por %p142, %p143
    %p145 = scmp.ne.s32.totalorder %s133, %s134
    %p146 = scmp.eq.s32.totalorder %s19, 1
    %p147 = por %p145, %p146
    %p149 = scmp.ne.s32.totalorder %s134, %s148
    %p150 = scmp.eq.s32.totalorder %s19, 0
    %p151 = por %p149, %p150
    %s153 = sadd.s32 %s152, 1
    %p156 = scmp.eq.s32.totalorder %s13, 1
    %p157 = scmp.ne.s32.totalorder %s152, %s154
    %p158 = scmp.eq.s32.totalorder %s13, 0
    %p159 = por %p157, %p158
    %p160 = scmp.ne.s32.totalorder %s152, %s154
    %p161 = scmp.eq.s32.totalorder %s18, 1
    %p162 = por %p160, %p161
    %p163 = scmp.ne.s32.totalorder %s154, %s155
    %p164 = scmp.eq.s32.totalorder %s18, 0
    %p165 = por %p163, %p164
    %p166 = scmp.ne.s32.totalorder %s154, %s155
    %p167 = scmp.eq.s32.totalorder %s19, 1
    %p168 = por %p166, %p167
    %p170 = scmp.ne.s32.totalorder %s155, %s169
    %p171 = scmp.eq.s32.totalorder %s19, 0
    %p172 = por %p170, %p171
    %s173 = ssub.s32 %s13, %s20
    %p174 = scmp.eq.s32.totalorder %s173, 0
    %s176 = sadd.s32 %s175, 1
    %s177 = scalar_select %p174, %s175, %s176
    %p180 = pneg %p174
    %p181 = scmp.eq.s32.totalorder %s13, 1
    %p182 = por %p180, %p181
    %p183 = scmp.ne.s32.totalorder %s175, %s178
    %p184 = scmp.eq.s32.totalorder %s13, 0
    %p185 = por %p183, %p184
    %p186 = scmp.ne.s32.totalorder %s175, %s178
    %p187 = scmp.eq.s32.totalorder %s18, 1
    %p188 = por %p186, %p187
    %p189 = scmp.ne.s32.totalorder %s178, %s179
    %p190 = scmp.eq.s32.totalorder %s18, 0
    %p191 = por %p189, %p190
    %p192 = scmp.ne.s32.totalorder %s178, %s179
    %p193 = scmp.eq.s32.totalorder %s19, 1
    %p194 = por %p192, %p193
    %p196 = scmp.ne.s32.totalorder %s179, %s195
    %p197 = scmp.eq.s32.totalorder %s19, 0
    %p198 = por %p196, %p197
    %p199 = scmp.le.s32.totalorder 1, %s13
    %p200 = scmp.lt.s32.totalorder %s13, 3
    %p201 = pnand %p199, %p200
    %p202 = pneg %p201
    // Predicated region
    $region9: #{ldiscriminator_forward.1} parent=5 // pred_check
      _
    $region10: #{ldiscriminator_forward.1} parent=5 // pred_check_branch
      %204 = sbr.rel (%p201) target = $region12
    $region11: #{ldiscriminator_forward.1} parent=5 // pred_region
      %s205 = ssub.s32 %s13, 1
      // Predicated region
      $region13: #{ldiscriminator_forward.1} parent=11 // pred_check
        %p206 = pneg %p60
      $region14: #{ldiscriminator_forward.1} parent=11 // pred_check_branch
        %208 = sbr.rel (%p206) target = $region16
      $region15: #{ldiscriminator_forward.1} parent=11 // pred_region
        _
      $region16: #{ldiscriminator_forward.1} parent=11 // pred_fallthru
        _
      // Predicated region
      $region17: #{ldiscriminator_forward.1} parent=11 // pred_check
        %p209 = pneg %p81
      $region18: #{ldiscriminator_forward.1} parent=11 // pred_check_branch
        %211 = sbr.rel (%p209) target = $region20
      $region19: #{ldiscriminator_forward.1} parent=11 // pred_region
        _
      $region20: #{ldiscriminator_forward.1} parent=11 // pred_fallthru
        _
      // Predicated region
      $region21: #{ldiscriminator_forward.1} parent=11 // pred_check
        %p212 = pneg %p102
      $region22: #{ldiscriminator_forward.1} parent=11 // pred_check_branch
        %214 = sbr.rel (%p212) target = $region24
      $region23: #{ldiscriminator_forward.1} parent=11 // pred_region
        _
      $region24: #{ldiscriminator_forward.1} parent=11 // pred_fallthru
        _
      // Predicated region
      $region25: #{ldiscriminator_forward.1} parent=11 // pred_check
        %p215 = pneg %p123
      $region26: #{ldiscriminator_forward.1} parent=11 // pred_check_branch
        %217 = sbr.rel (%p215) target = $region28
      $region27: #{ldiscriminator_forward.1} parent=11 // pred_region
        _
      $region28: #{ldiscriminator_forward.1} parent=11 // pred_fallthru
        _
      // Predicated region
      $region29: #{ldiscriminator_forward.1} parent=11 // pred_check
        %p218 = pneg %p144
      $region30: #{ldiscriminator_forward.1} parent=11 // pred_check_branch
        %220 = sbr.rel (%p218) target = $region32
      $region31: #{ldiscriminator_forward.1} parent=11 // pred_region
        _
      $region32: #{ldiscriminator_forward.1} parent=11 // pred_fallthru
        _
      // Predicated region
      $region33: #{ldiscriminator_forward.1} parent=11 // pred_check
        %p221 = pneg %p165
      $region34: #{ldiscriminator_forward.1} parent=11 // pred_check_branch
        %223 = sbr.rel (%p221) target = $region36
      $region35: #{ldiscriminator_forward.1} parent=11 // pred_region
        _
      $region36: #{ldiscriminator_forward.1} parent=11 // pred_fallthru
        _
    $region12: #{ldiscriminator_forward.1} parent=5 // pred_fallthru
      _
    %p224 = scmp.lt.s32.totalorder %s13, 2
    // Predicated region
    $region37: #{ldiscriminator_forward.1} parent=5 // pred_check
      %p225 = pneg %p224
    $region38: #{ldiscriminator_forward.1} parent=5 // pred_check_branch
      %227 = sbr.rel (%p225) target = $region40
    $region39: #{ldiscriminator_forward.1} parent=5 // pred_region
      // Predicated region
      $region41: #{ldiscriminator_forward.1} parent=39 // pred_check
        %p228 = pneg %p33
      $region42: #{ldiscriminator_forward.1} parent=39 // pred_check_branch
        %230 = sbr.rel (%p228) target = $region44
      $region43: #{ldiscriminator_forward.1} parent=39 // pred_region
        %p231 = scmp.lt.s32.totalorder %s13, 1
        %s232 = scalar_select %p231, %s13, 1
        %s233 = smul.addr %s232, 8
        %s234 = scalar_lea.vmem %s0, %s233
      $region44: #{ldiscriminator_forward.1} parent=39 // pred_fallthru
        _
    $region40: #{ldiscriminator_forward.1} parent=5 // pred_fallthru
      _
    %p235 = scmp.le.s32.totalorder 1, %s13
    %p236 = scmp.lt.s32.totalorder %s13, 3
    %p237 = pnand %p235, %p236
    %p238 = pneg %p237
    // Predicated region
    $region45: #{ldiscriminator_forward.1} parent=5 // pred_check
      _
    $region46: #{ldiscriminator_forward.1} parent=5 // pred_check_branch
      %240 = sbr.rel (%p237) target = $region48
    $region47: #{ldiscriminator_forward.1} parent=5 // pred_region
      %s241 = ssub.s32 %s13, 1
      %p242 = scmp.lt.s32.totalorder %s18, 1
      %s243 = scalar_select %p242, %s18, 1
      %s244 = smul.addr %s243, 8
      %s245 = scalar_lea.vmem %s0, %s244
      %p246 = pneg %p39
      %p247 = pneg %p36
      %p248 = pneg %p60
      %p249 = pneg %p57
      %p250 = pneg %p81
      %p251 = pneg %p78
      %p252 = pneg %p102
      %p253 = pneg %p99
      %p254 = pneg %p123
      %p255 = pneg %p120
      %p256 = pneg %p144
      %p257 = pneg %p141
      %p258 = pneg %p165
      %p259 = pneg %p162
      %p260 = pneg %p191
      %p261 = pneg %p188
      %p262 = scmp.lt.s32.totalorder %s18, 1
      %s263 = scalar_select %p262, %s18, 1
      %s264 = smul.addr %s263, 8
      %s265 = scalar_lea.vmem %s7, %s264
      %p266 = scmp.lt.s32.totalorder %s18, 1
      %s267 = scalar_select %p266, %s18, 1
      %s268 = smul.addr %s267, 8
      %s269 = scalar_lea.vmem %s0, %s268
      %p270 = scmp.lt.s32.totalorder %s18, 1
      %s271 = scalar_select %p270, %s18, 1
      %s272 = smul.addr %s271, 8
      %s273 = scalar_lea.vmem %s7, %s272
      %v274 = vld [vmem:[%s269] sm:$0xff]
      %v275 = vld [vmem:[%s1] sm:$0xff]
      %v276 = vld [vmem:[%s1 + $0x8] sm:$0xff]
      %v277 = vld [vmem:[%s1 + $0x10] sm:$0xff]
      %v278 = vld [vmem:[%s1 + $0x18] sm:$0xff]
      %v279 = vld [vmem:[%s1 + $0x20] sm:$0xff]
      %v280 = vld [vmem:[%s1 + $0x28] sm:$0xff]
      %v281 = vld [vmem:[%s1 + $0x30] sm:$0xff]
      %v282 = vld [vmem:[%s1 + $0x38] sm:$0xff]
      %v283 = vld [vmem:[%s1 + $0x40] sm:$0xff]
      %v284 = vld [vmem:[%s1 + $0x48] sm:$0xff]
      %v285 = vld [vmem:[%s1 + $0x50] sm:$0xff]
      %v286 = vld [vmem:[%s1 + $0x58] sm:$0xff]
      %v287 = vld [vmem:[%s1 + $0x60] sm:$0xff]
      %v288 = vld [vmem:[%s1 + $0x68] sm:$0xff]
      %v289 = vld [vmem:[%s1 + $0x70] sm:$0xff]
      %v290 = vld [vmem:[%s1 + $0x78] sm:$0xff]
      %v291 = vld [vmem:[%s2] sm:$0x1]
      %v293 = vlaneseq
      %v294 = vshrl.u32 %v293, 7
      %v295 = vsub.s32 0, %v294
      %v296 = vrot.slane %v291, %v295
      %298 = vmatprep.subr.mxu0 0.0
      %299 = vmatpush1.msra.mxu0 %v275
      %300 = vmatprep.subr.mxu0 0.0
      %301 = vmatpush1.msra.mxu0 %v276
      %302 = vmatprep.subr.mxu0 0.0
      %303 = vmatpush1.msra.mxu0 %v277
      %304 = vmatprep.subr.mxu0 0.0
      %305 = vmatpush1.msra.mxu0 %v278
      %306 = vmatprep.subr.mxu0 0.0
      %307 = vmatpush1.msra.mxu0 %v279
      %308 = vmatprep.subr.mxu0 0.0
      %309 = vmatpush1.msra.mxu0 %v280
      %310 = vmatprep.subr.mxu0 0.0
      %311 = vmatpush1.msra.mxu0 %v281
      %312 = vmatprep.subr.mxu0 0.0
      %313 = vmatpush1.msra.mxu0 %v282
      %314 = vmatprep.subr.mxu0 0.0
      %315 = vmatpush1.msra.mxu0 %v283
      %316 = vmatprep.subr.mxu0 0.0
      %317 = vmatpush1.msra.mxu0 %v284
      %318 = vmatprep.subr.mxu0 0.0
      %319 = vmatpush1.msra.mxu0 %v285
      %320 = vmatprep.subr.mxu0 0.0
      %321 = vmatpush1.msra.mxu0 %v286
      %322 = vmatprep.subr.mxu0 0.0
      %323 = vmatpush1.msra.mxu0 %v287
      %324 = vmatprep.subr.mxu0 0.0
      %325 = vmatpush1.msra.mxu0 %v288
      %326 = vmatprep.subr.mxu0 0.0
      %327 = vmatpush1.msra.mxu0 %v289
      %328 = vmatprep.subr.mxu0 0.0
      %329 = vmatpush1.msra.mxu0 %v290
      %330 = vmatprep.subr.mxu0 0.0
      %331 = vmatpush1.msra.mxu0 0.0
      %332 = vmatprep.subr.mxu0 0.0
      %333 = vmatpush1.msra.mxu0 0.0
      %334 = vmatprep.subr.mxu0 0.0
      %335 = vmatpush1.msra.mxu0 0.0
      %336 = vmatprep.subr.mxu0 0.0
      %337 = vmatpush1.msra.mxu0 0.0
      %338 = vmatprep.subr.mxu0 0.0
      %339 = vmatpush1.msra.mxu0 0.0
      %340 = vmatprep.subr.mxu0 0.0
      %341 = vmatpush1.msra.mxu0 0.0
      %342 = vmatprep.subr.mxu0 0.0
      %343 = vmatpush1.msra.mxu0 0.0
      %344 = vmatprep.subr.mxu0 0.0
      %345 = vmatpush1.msra.mxu0 0.0
      %346 = vmatprep.subr.mxu0 0.0
      %347 = vmatpush1.msra.mxu0 0.0
      %348 = vmatprep.subr.mxu0 0.0
      %349 = vmatpush1.msra.mxu0 0.0
      %350 = vmatprep.subr.mxu0 0.0
      %351 = vmatpush1.msra.mxu0 0.0
      %352 = vmatprep.subr.mxu0 0.0
      %353 = vmatpush1.msra.mxu0 0.0
      %354 = vmatprep.subr.mxu0 0.0
      %355 = vmatpush1.msra.mxu0 0.0
      %356 = vmatprep.subr.mxu0 0.0
      %357 = vmatpush1.msra.mxu0 0.0
      %358 = vmatprep.subr.mxu0 0.0
      %359 = vmatpush1.msra.mxu0 0.0
      %360 = vmatprep.subr.mxu0 0.0
      %361 = vmatpush1.msra.mxu0 0.0
      %362 = vmatprep.mubr.f32.mxu0 0.0
      %363 = vmatmul.mubr.f32.gmra.mrb[0].mxu0 %v274
      %v364 = vpop.f32.mrb[0].mxu0
      %v365 = vadd.f32 %v296, %v364
      %v366 = vpop.f32.mrb[0].mxu0
      %367 = vdwg.mxu0
      %vm368 = vcmp.ge.f32.partialorder %v365, 0.0
      %v369 = vmul.f32 %v365, 0.2
      %v370 = vsel %vm368, %v365, %v369
      %v371 = vld [vmem:[%s3] sm:$0xff]
      %v372 = vld [vmem:[%s3 + $0x8] sm:$0xff]
      %v373 = vld [vmem:[%s3 + $0x10] sm:$0xff]
      %v374 = vld [vmem:[%s3 + $0x18] sm:$0xff]
      %v375 = vld [vmem:[%s3 + $0x20] sm:$0xff]
      %v376 = vld [vmem:[%s3 + $0x28] sm:$0xff]
      %v377 = vld [vmem:[%s3 + $0x30] sm:$0xff]
      %v378 = vld [vmem:[%s3 + $0x38] sm:$0xff]
      %v379 = vld [vmem:[%s4] sm:$0x1]
      %v381 = vlaneseq
      %v382 = vshrl.u32 %v381, 7
      %v383 = vsub.s32 0, %v382
      %v384 = vrot.slane %v379, %v383
      %vm386 = vcmask 523264
      %v388 = vsel %vm386, %v370, 0
      %390 = vmatprep.subr.mxu0 0.0
      %391 = vmatpush1.msra.mxu0 %v371
      %392 = vmatprep.subr.mxu0 0.0
      %393 = vmatpush1.msra.mxu0 %v372
      %394 = vmatprep.subr.mxu0 0.0
      %395 = vmatpush1.msra.mxu0 %v373
      %396 = vmatprep.subr.mxu0 0.0
      %397 = vmatpush1.msra.mxu0 %v374
      %398 = vmatprep.subr.mxu0 0.0
      %399 = vmatpush1.msra.mxu0 %v375
      %400 = vmatprep.subr.mxu0 0.0
      %401 = vmatpush1.msra.mxu0 %v376
      %402 = vmatprep.subr.mxu0 0.0
      %403 = vmatpush1.msra.mxu0 %v377
      %404 = vmatprep.subr.mxu0 0.0
      %405 = vmatpush1.msra.mxu0 %v378
      %406 = vmatprep.subr.mxu0 0.0
      %407 = vmatpush1.msra.mxu0 0.0
      %408 = vmatprep.subr.mxu0 0.0
      %409 = vmatpush1.msra.mxu0 0.0
      %410 = vmatprep.subr.mxu0 0.0
      %411 = vmatpush1.msra.mxu0 0.0
      %412 = vmatprep.subr.mxu0 0.0
      %413 = vmatpush1.msra.mxu0 0.0
      %414 = vmatprep.subr.mxu0 0.0
      %415 = vmatpush1.msra.mxu0 0.0
      %416 = vmatprep.subr.mxu0 0.0
      %417 = vmatpush1.msra.mxu0 0.0
      %418 = vmatprep.subr.mxu0 0.0
      %419 = vmatpush1.msra.mxu0 0.0
      %420 = vmatprep.subr.mxu0 0.0
      %421 = vmatpush1.msra.mxu0 0.0
      %422 = vmatprep.subr.mxu0 0.0
      %423 = vmatpush1.msra.mxu0 0.0
      %424 = vmatprep.subr.mxu0 0.0
      %425 = vmatpush1.msra.mxu0 0.0
      %426 = vmatprep.subr.mxu0 0.0
      %427 = vmatpush1.msra.mxu0 0.0
      %428 = vmatprep.subr.mxu0 0.0
      %429 = vmatpush1.msra.mxu0 0.0
      %430 = vmatprep.subr.mxu0 0.0
      %431 = vmatpush1.msra.mxu0 0.0
      %432 = vmatprep.subr.mxu0 0.0
      %433 = vmatpush1.msra.mxu0 0.0
      %434 = vmatprep.subr.mxu0 0.0
      %435 = vmatpush1.msra.mxu0 0.0
      %436 = vmatprep.subr.mxu0 0.0
      %437 = vmatpush1.msra.mxu0 0.0
      %438 = vmatprep.subr.mxu0 0.0
      %439 = vmatpush1.msra.mxu0 0.0
      %440 = vmatprep.subr.mxu0 0.0
      %441 = vmatpush1.msra.mxu0 0.0
      %442 = vmatprep.subr.mxu0 0.0
      %443 = vmatpush1.msra.mxu0 0.0
      %444 = vmatprep.subr.mxu0 0.0
      %445 = vmatpush1.msra.mxu0 0.0
      %446 = vmatprep.subr.mxu0 0.0
      %447 = vmatpush1.msra.mxu0 0.0
      %448 = vmatprep.subr.mxu0 0.0
      %449 = vmatpush1.msra.mxu0 0.0
      %450 = vmatprep.subr.mxu0 0.0
      %451 = vmatpush1.msra.mxu0 0.0
      %452 = vmatprep.subr.mxu0 0.0
      %453 = vmatpush1.msra.mxu0 0.0
      %454 = vmatprep.mubr.f32.mxu0 0.0
      %455 = vmatmul.mubr.f32.gmra.mrb[0].mxu0 %v388
      %v456 = vpop.f32.mrb[0].mxu0
      %v457 = vadd.f32 %v384, %v456
      %v458 = vpop.f32.mrb[0].mxu0
      %459 = vdwg.mxu0
      %vm460 = vcmp.ge.f32.partialorder %v457, 0.0
      %v461 = vmul.f32 %v457, 0.2
      %v462 = vsel %vm460, %v457, %v461
      %v463 = vld [vmem:[%s5] sm:$0xff]
      %v464 = vld [vmem:[%s5 + $0x8] sm:$0xff]
      %v465 = vld [vmem:[%s5 + $0x10] sm:$0xff]
      %v466 = vld [vmem:[%s5 + $0x18] sm:$0xff]
      %v467 = vld [vmem:[%s6] sm:$0x1]
      %v469 = vlaneseq
      %v470 = vshrl.u32 %v469, 7
      %v471 = vsub.s32 0, %v470
      %v472 = vrot.slane %v467, %v471
      %vm474 = vcmask 261120
      %v476 = vsel %vm474, %v462, 0
      %478 = vmatprep.subr.mxu0 0.0
      %479 = vmatpush1.msra.mxu0 %v463
      %480 = vmatprep.subr.mxu0 0.0
      %481 = vmatpush1.msra.mxu0 %v464
      %482 = vmatprep.subr.mxu0 0.0
      %483 = vmatpush1.msra.mxu0 %v465
      %484 = vmatprep.subr.mxu0 0.0
      %485 = vmatpush1.msra.mxu0 %v466
      %486 = vmatprep.subr.mxu0 0.0
      %487 = vmatpush1.msra.mxu0 0.0
      %488 = vmatprep.subr.mxu0 0.0
      %489 = vmatpush1.msra.mxu0 0.0
      %490 = vmatprep.subr.mxu0 0.0
      %491 = vmatpush1.msra.mxu0 0.0
      %492 = vmatprep.subr.mxu0 0.0
      %493 = vmatpush1.msra.mxu0 0.0
      %494 = vmatprep.subr.mxu0 0.0
      %495 = vmatpush1.msra.mxu0 0.0
      %496 = vmatprep.subr.mxu0 0.0
      %497 = vmatpush1.msra.mxu0 0.0
      %498 = vmatprep.subr.mxu0 0.0
      %499 = vmatpush1.msra.mxu0 0.0
      %500 = vmatprep.subr.mxu0 0.0
      %501 = vmatpush1.msra.mxu0 0.0
      %502 = vmatprep.subr.mxu0 0.0
      %503 = vmatpush1.msra.mxu0 0.0
      %504 = vmatprep.subr.mxu0 0.0
      %505 = vmatpush1.msra.mxu0 0.0
      %506 = vmatprep.subr.mxu0 0.0
      %507 = vmatpush1.msra.mxu0 0.0
      %508 = vmatprep.subr.mxu0 0.0
      %509 = vmatpush1.msra.mxu0 0.0
      %510 = vmatprep.subr.mxu0 0.0
      %511 = vmatpush1.msra.mxu0 0.0
      %512 = vmatprep.subr.mxu0 0.0
      %513 = vmatpush1.msra.mxu0 0.0
      %514 = vmatprep.subr.mxu0 0.0
      %515 = vmatpush1.msra.mxu0 0.0
      %516 = vmatprep.subr.mxu0 0.0
      %517 = vmatpush1.msra.mxu0 0.0
      %518 = vmatprep.subr.mxu0 0.0
      %519 = vmatpush1.msra.mxu0 0.0
      %520 = vmatprep.subr.mxu0 0.0
      %521 = vmatpush1.msra.mxu0 0.0
      %522 = vmatprep.subr.mxu0 0.0
      %523 = vmatpush1.msra.mxu0 0.0
      %524 = vmatprep.subr.mxu0 0.0
      %525 = vmatpush1.msra.mxu0 0.0
      %526 = vmatprep.subr.mxu0 0.0
      %527 = vmatpush1.msra.mxu0 0.0
      %528 = vmatprep.subr.mxu0 0.0
      %529 = vmatpush1.msra.mxu0 0.0
      %530 = vmatprep.subr.mxu0 0.0
      %531 = vmatpush1.msra.mxu0 0.0
      %532 = vmatprep.subr.mxu0 0.0
      %533 = vmatpush1.msra.mxu0 0.0
      %534 = vmatprep.subr.mxu0 0.0
      %535 = vmatpush1.msra.mxu0 0.0
      %536 = vmatprep.subr.mxu0 0.0
      %537 = vmatpush1.msra.mxu0 0.0
      %538 = vmatprep.subr.mxu0 0.0
      %539 = vmatpush1.msra.mxu0 0.0
      %540 = vmatprep.subr.mxu0 0.0
      %541 = vmatpush1.msra.mxu0 0.0
      %542 = vmatprep.mubr.f32.mxu0 0.0
      %543 = vmatmul.mubr.f32.gmra.mrb[0].mxu0 %v476
      %v544 = vpop.f32.mrb[0].mxu0
      %v545 = vadd.f32 %v472, %v544
      %v546 = vpop.f32.mrb[0].mxu0
      %547 = vdwg.mxu0
      %vm548 = vcmask 64512
      %549 = vst.msk [vmem:[%s273] sm:$0xff] %vm548, %v545
      %p550 = scmp.lt.s32.totalorder %s18, 1
      %s551 = scalar_select %p550, %s18, 1
      %s552 = smul.addr %s551, 8
      %s553 = scalar_lea.vmem %s7, %s552
      // Predicated region
      $region49: #{ldiscriminator_forward.1} parent=47 // pred_check
        %p554 = pneg %p188
      $region50: #{ldiscriminator_forward.1} parent=47 // pred_check_branch
        %556 = sbr.rel (%p554) target = $region52
      $region51: #{ldiscriminator_forward.1} parent=47 // pred_region
        _
      $region52: #{ldiscriminator_forward.1} parent=47 // pred_fallthru
        _
    $region48: #{ldiscriminator_forward.1} parent=5 // pred_fallthru
      _
    %p557 = scmp.le.s32.totalorder 2, %s13
    // Predicated region
    $region53: #{ldiscriminator_forward.1} parent=5 // pred_check
      %p558 = pneg %p557
    $region54: #{ldiscriminator_forward.1} parent=5 // pred_check_branch
      %560 = sbr.rel (%p558) target = $region56
    $region55: #{ldiscriminator_forward.1} parent=5 // pred_region
      %s561 = ssub.s32 %s13, 2
      // Predicated region
      $region57: #{ldiscriminator_forward.1} parent=55 // pred_check
        %p562 = pneg %p194
      $region58: #{ldiscriminator_forward.1} parent=55 // pred_check_branch
        %564 = sbr.rel (%p562) target = $region60
      $region59: #{ldiscriminator_forward.1} parent=55 // pred_region
        %p565 = scmp.lt.s32.totalorder %s19, 1
        %s566 = scalar_select %p565, %s19, 1
        %s567 = smul.addr %s566, 8
        %s568 = scalar_lea.vmem %s7, %s567
      $region60: #{ldiscriminator_forward.1} parent=55 // pred_fallthru
        _
    $region56: #{ldiscriminator_forward.1} parent=5 // pred_fallthru
      _
  $region6: #{ldiscriminator_forward.1} parent=0 // loop_footer
    %s17 = sadd.s32 1, %s13
  $region7: #{ldiscriminator_forward.1} parent=0 // loop_footer_branch
    %12 = sbr.rel target = $region3
  $region8: #{ldiscriminator_forward.1} parent=0 // loop_exit
    _

</llo_original>
